<compile_context>
chip_gen: v7x
topology: tpu7x:2x2x1
jax: 0.10.0
libtpu: 0.0.40
codegen_flags: <defaults>
</compile_context>

<pallas_src>
import functools
import math

import jax
import jax.numpy as jnp
from jax.experimental import pallas as pl
from jax.experimental.pallas import tpu as pltpu

INV_SQRT_2 = 1.0 / math.sqrt(2.0)


def _round_up(x, m):
    return -(-x // m) * m


def _ms2st_kernel(mid_ref, side_ref, out_ref, *, norm):
    # mid_ref / side_ref: (B, TL) tiles.
    # out_ref: (2B, TL) tile; rows interleaved as [L0, R0, L1, R1, ...], which is
    # exactly the row-major view of the (B, 2, TL) output slab.
    m = mid_ref[...]
    s = side_ref[...]
    left = (m + s) * norm
    right = (m - s) * norm
    b, tl = m.shape
    # Interleave along the sublane axis and write the whole tile with a single
    # dense store (lane-dense, no masked per-channel partial stores).
    out_ref[...] = jnp.stack([left, right], axis=1).reshape(2 * b, tl)


def mid_side_to_stereo(mid, side, normalize=True, max_block_bytes=2 << 20):
    """mid, side: (B, 1, L) -> (B, 2, L). Elementwise hot path runs in Pallas."""
    b, c, l = mid.shape
    assert c == 1
    assert side.shape == (b, 1, l)
    norm = INV_SQRT_2 if normalize else 0.5
    dtype = mid.dtype
    itemsize = jnp.dtype(dtype).itemsize

    # Squeeze the degenerate channel dim (free reshape) so blocks are 2-D and the
    # batch dim sits on sublanes without a 1 -> 8 pad.
    mid2 = mid.reshape(b, l)
    side2 = side.reshape(b, l)

    # ---- time tile (lane axis), multiple of 128 ------------------------------
    # Budget against the *sublane-padded* VMEM footprint of one input block.
    sub_in = _round_up(b, 8)
    tl = (max_block_bytes // (sub_in * itemsize)) // 128 * 128
    tl = max(tl, 128)
    l128 = _round_up(l, 128)
    tl = min(tl, l128)
    # Prefer >= 2 grid steps: enables DMA/compute overlap and lets both v7x
    # TensorCores contribute via the ("parallel",) axis.
    if tl >= l128 and l128 >= 256:
        tl = max(128, (l128 // 2) // 128 * 128)

    # Pad L so the grid divides exactly; the pad is sliced off afterwards.
    l_pad = _round_up(l, tl)
    if l_pad != l:
        pad = ((0, 0), (0, l_pad - l))
        mid2 = jnp.pad(mid2, pad)
        side2 = jnp.pad(side2, pad)
    grid = (l_pad // tl,)

    # ---- explicit VMEM budget (double-buffered in/out + headroom) ------------
    in_block = sub_in * tl * itemsize
    out_block = _round_up(2 * b, 8) * tl * itemsize
    vmem_need = 2 * (2 * in_block + out_block)
    vmem_limit = int(min(max(2 * vmem_need, 16 << 20), 48 << 20))

    kernel = functools.partial(_ms2st_kernel, norm=norm)

    out2 = pl.pallas_call(
        kernel,
        out_shape=jax.ShapeDtypeStruct((2 * b, l_pad), dtype),
        grid_spec=pltpu.PrefetchScalarGridSpec(
            num_scalar_prefetch=0,
            grid=grid,
            in_specs=[
                pl.BlockSpec((b, tl), lambda i: (0, i)),
                pl.BlockSpec((b, tl), lambda i: (0, i)),
            ],
            out_specs=pl.BlockSpec((2 * b, tl), lambda i: (0, i)),
        ),
        compiler_params=pltpu.CompilerParams(
            dimension_semantics=("parallel",),
            vmem_limit_bytes=vmem_limit,
        ),
    )(mid2, side2)

    # (2B, L) is the row-major view of (B, 2, L): this reshape is free.
    out = out2.reshape(b, 2, l_pad)
    if l_pad != l:
        out = out[:, :, :l]
    return out


if __name__ == "__main__":
    key = jax.random.PRNGKey(0)
    k1, k2 = jax.random.split(key)
    B, L = 2, 1024
    mid = jax.random.normal(k1, (B, 1, L), dtype=jnp.float32)
    side = jax.random.normal(k2, (B, 1, L), dtype=jnp.float32)

    out = jax.block_until_ready(mid_side_to_stereo(mid, side, normalize=True))
    ref = jnp.concatenate([mid + side, mid - side], axis=1) * INV_SQRT_2
    assert out.shape == (B, 2, L)
    assert jnp.allclose(out, ref, atol=1e-6, rtol=1e-6)

    out2 = jax.block_until_ready(mid_side_to_stereo(mid, side, normalize=False))
    ref2 = jnp.concatenate([mid + side, mid - side], axis=1) * 0.5
    assert jnp.allclose(out2, ref2, atol=1e-6, rtol=1e-6)

    print("KERNEL_OK")
</pallas_src>

<mosaic_0001>
module attributes {stable_mosaic.version = 11 : i64} {
  func.func @_ms2st_kernel(%arg0: i32, %arg1: memref<2x512xf32, #tpu.memory_space<vmem>>, %arg2: memref<2x512xf32, #tpu.memory_space<vmem>>, %arg3: memref<4x512xf32, #tpu.memory_space<vmem>>) attributes {dimension_semantics = [#tpu.dimension_semantics<parallel>], iteration_bounds = array<i64: 2>, scalar_prefetch = 0 : i64, scratch_operands = 0 : i64, tpu.core_type = #tpu.core_type<tc>, window_params = [{transform_indices = @transform_0, window_bounds = array<i64: 2, 512>}, {transform_indices = @transform_1, window_bounds = array<i64: 2, 512>}, {transform_indices = @transform_2, window_bounds = array<i64: 4, 512>}]} {
    %c0 = arith.constant 0 : index
    %c0_0 = arith.constant 0 : index
    %0 = vector.load %arg1[%c0, %c0_0] : memref<2x512xf32, #tpu.memory_space<vmem>>, vector<2x512xf32>
    %c0_1 = arith.constant 0 : index
    %c0_2 = arith.constant 0 : index
    %1 = vector.load %arg2[%c0_1, %c0_2] : memref<2x512xf32, #tpu.memory_space<vmem>>, vector<2x512xf32>
    %2 = arith.addf %0, %1 : vector<2x512xf32>
    %cst = arith.constant 0.707106769 : f32
    %3 = vector.broadcast %cst : f32 to vector<2x512xf32>
    %4 = arith.mulf %2, %3 : vector<2x512xf32>
    %5 = arith.subf %0, %1 : vector<2x512xf32>
    %cst_3 = arith.constant 0.707106769 : f32
    %6 = vector.broadcast %cst_3 : f32 to vector<2x512xf32>
    %7 = arith.mulf %5, %6 : vector<2x512xf32>
    %8 = vector.shape_cast %4 : vector<2x512xf32> to vector<2x1x512xf32>
    %9 = vector.shape_cast %7 : vector<2x512xf32> to vector<2x1x512xf32>
    %10 = tpu.concatenate %8, %9 in 1 : vector<2x1x512xf32>, vector<2x1x512xf32> -> vector<2x2x512xf32>
    %11 = vector.shape_cast %10 : vector<2x2x512xf32> to vector<4x512xf32>
    %c0_4 = arith.constant 0 : index
    %c0_5 = arith.constant 0 : index
    %12 = vector.load %arg3[%c0_4, %c0_5] : memref<4x512xf32, #tpu.memory_space<vmem>>, vector<4x512xf32>
    tpu.vector_store %arg3[%c0_4, %c0_5], %11 {strides = array<i32>} : memref<4x512xf32, #tpu.memory_space<vmem>>, vector<4x512xf32>,
    return
  }
  func.func @transform_0(%arg0: i32) -> (i32, i32) {
    %c0_i32 = arith.constant 0 : i32
    %c0_i32_0 = arith.constant 0 : i32
    return %c0_i32, %arg0 : i32, i32
  }
  func.func @transform_1(%arg0: i32) -> (i32, i32) {
    %c0_i32 = arith.constant 0 : i32
    %c0_i32_0 = arith.constant 0 : i32
    return %c0_i32, %arg0 : i32, i32
  }
  func.func @transform_2(%arg0: i32) -> (i32, i32) {
    %c0_i32 = arith.constant 0 : i32
    %c0_i32_0 = arith.constant 0 : i32
    return %c0_i32, %arg0 : i32, i32
  }
}

</mosaic_0001>

<llo_original>
// kernel: tpu_custom_call.1
$region0: #{tpu_custom_call.1}
  #allocation0 [shape = 'u32[]', space=smem, size = 0x4, offset = 0x4, fixed_abs, tag = 'smem constant byte address 0x4 - core index']
  #allocation1 [shape = 'u32[144,128]{1,0:T(1,128)}', space=vmem, size = 0x12000, scoped, tag = 'internal scratch']
  %s0 = inlined_call_operand.hbm [shape: f32[2,1024], index: 0, kind: input, shape index: {}]
  %s1 = inlined_call_operand.hbm [shape: f32[2,1024], index: 1, kind: input, shape index: {}]
  %s2 = inlined_call_operand.hbm [shape: f32[4,1024], index: 2, kind: output, shape index: {}]
  %s3 = sld [smem:[#allocation0]]
  $region49: #{tpu_custom_call.1} parent=0
    _
  %s5 = ssub.s32 1, %s3
  %s6 = scalar_select 0, %s5, %s3
  $region1: #{tpu_custom_call.1} parent=0
    #allocation2 [shape = 'u8[8192]{0}', space=vmem, size = 0x2000, scoped, tag = 'input window, operand 0']
    #allocation3 [shape = 's32[2]{0}', space=sflag, size = 0x8, scoped, tag = 'scoped memory for tpu_custom_call.1']
    #allocation4 [shape = 's32[2]{0}', space=sflag, size = 0x8, scoped, tag = 'scoped memory for tpu_custom_call.1']
    #allocation5 [shape = 'u8[8192]{0}', space=vmem, size = 0x2000, scoped, tag = 'input window, operand 1']
    #allocation6 [shape = 's32[2]{0}', space=sflag, size = 0x8, scoped, tag = 'scoped memory for tpu_custom_call.1']
    #allocation7 [shape = 'u8[16384]{0}', space=vmem, size = 0x4000, scoped, tag = 'output window, operand 0']
    %7 = vsyncpa [#allocation3], 0
    %s8 = scalar_lea.sflag [#allocation3], 1
    %9 = vsyncpa %s8, 0
    %10 = vsyncpa [#allocation6], 0
    %s11 = scalar_lea.sflag [#allocation6], 1
    %12 = vsyncpa %s11, 0
    %13 = vsyncpa [#allocation4], 0
    %s14 = scalar_lea.sflag [#allocation4], 1
    %15 = vsyncpa %s14, 0
    loop: start=0, step=1, limit=4
    $region2: #{tpu_custom_call.1} parent=1 // loop_pre_header
      _
    $region3: #{tpu_custom_call.1} parent=1 // loop_header
      %s17 = sphi 0, %s21
      %p18 = scmp.ge.s32.totalorder %s17, 4
      %s27 = sphi 0, %s29
      %s30 = sphi 0, %s27
      %s31 = sphi 0, %s30
      %s47 = sphi 0, %s31
      %s53 = sphi 0, %s55
      %s56 = sphi 0, %s53
      %s57 = sphi 0, %s56
      %s73 = sphi 0, %s57
      %s79 = sphi 0, %s81
      %s82 = sphi 0, %s79
      %s83 = sphi 0, %s82
      %s99 = sphi 0, %s83
    $region4: #{tpu_custom_call.1} parent=1 // loop_header_branch
      %20 = sbr.rel (%p18) target = $region8
    $region5: #{tpu_custom_call.1} parent=1 // loop_body
      %s22 = ssub.s32 %s17, 1
      %s23 = ssub.s32 %s17, 2
      %s24 = sadd.s32 %s17, 1
      %s25 = ssub.s32 %s17, %s24
      %p26 = scmp.eq.s32.totalorder %s25, 0
      %s28 = sadd.s32 %s27, 1
      %s29 = scalar_select %p26, %s27, %s28
      %p32 = pneg %p26
      %p33 = scmp.eq.s32.totalorder %s17, 1
      %p34 = por %p32, %p33
      %p35 = scmp.ne.s32.totalorder %s27, %s30
      %p36 = scmp.eq.s32.totalorder %s17, 0
      %p37 = por %p35, %p36
      %p38 = scmp.ne.s32.totalorder %s27, %s30
      %p39 = scmp.eq.s32.totalorder %s22, 1
      %p40 = por %p38, %p39
      %p41 = scmp.ne.s32.totalorder %s30, %s31
      %p42 = scmp.eq.s32.totalorder %s22, 0
      %p43 = por %p41, %p42
      %p44 = scmp.ne.s32.totalorder %s30, %s31
      %p45 = scmp.eq.s32.totalorder %s23, 1
      %p46 = por %p44, %p45
      %p48 = scmp.ne.s32.totalorder %s31, %s47
      %p49 = scmp.eq.s32.totalorder %s23, 0
      %p50 = por %p48, %p49
      %s51 = ssub.s32 %s17, %s24
      %p52 = scmp.eq.s32.totalorder %s51, 0
      %s54 = sadd.s32 %s53, 1
      %s55 = scalar_select %p52, %s53, %s54
      %p58 = pneg %p52
      %p59 = scmp.eq.s32.totalorder %s17, 1
      %p60 = por %p58, %p59
      %p61 = scmp.ne.s32.totalorder %s53, %s56
      %p62 = scmp.eq.s32.totalorder %s17, 0
      %p63 = por %p61, %p62
      %p64 = scmp.ne.s32.totalorder %s53, %s56
      %p65 = scmp.eq.s32.totalorder %s22, 1
      %p66 = por %p64, %p65
      %p67 = scmp.ne.s32.totalorder %s56, %s57
      %p68 = scmp.eq.s32.totalorder %s22, 0
      %p69 = por %p67, %p68
      %p70 = scmp.ne.s32.totalorder %s56, %s57
      %p71 = scmp.eq.s32.totalorder %s23, 1
      %p72 = por %p70, %p71
      %p74 = scmp.ne.s32.totalorder %s57, %s73
      %p75 = scmp.eq.s32.totalorder %s23, 0
      %p76 = por %p74, %p75
      %s77 = ssub.s32 %s17, %s24
      %p78 = scmp.eq.s32.totalorder %s77, 0
      %s80 = sadd.s32 %s79, 1
      %s81 = scalar_select %p78, %s79, %s80
      %p84 = pneg %p78
      %p85 = scmp.eq.s32.totalorder %s17, 1
      %p86 = por %p84, %p85
      %p87 = scmp.ne.s32.totalorder %s79, %s82
      %p88 = scmp.eq.s32.totalorder %s17, 0
      %p89 = por %p87, %p88
      %p90 = scmp.ne.s32.totalorder %s79, %s82
      %p91 = scmp.eq.s32.totalorder %s22, 1
      %p92 = por %p90, %p91
      %p93 = scmp.ne.s32.totalorder %s82, %s83
      %p94 = scmp.eq.s32.totalorder %s22, 0
      %p95 = por %p93, %p94
      %p96 = scmp.ne.s32.totalorder %s82, %s83
      %p97 = scmp.eq.s32.totalorder %s23, 1
      %p98 = por %p96, %p97
      %p100 = scmp.ne.s32.totalorder %s83, %s99
      %p101 = scmp.eq.s32.totalorder %s23, 0
      %p102 = por %p100, %p101
      %p103 = scmp.le.s32.totalorder 1, %s17
      %p104 = scmp.lt.s32.totalorder %s17, 3
      %p105 = pnand %p103, %p104
      %p106 = pneg %p105
      // Predicated region
      $region9: #{tpu_custom_call.1} parent=5 // pred_check
        _
      $region10: #{tpu_custom_call.1} parent=5 // pred_check_branch
        %108 = sbr.rel (%p105) target = $region12
      $region11: #{tpu_custom_call.1} parent=5 // pred_region
        %s109 = ssub.s32 %s17, 1
      $region12: #{tpu_custom_call.1} parent=5 // pred_fallthru
        _
      %p110 = scmp.lt.s32.totalorder %s17, 2
      // Predicated region
      $region13: #{tpu_custom_call.1} parent=5 // pred_check
        %p111 = pneg %p110
      $region14: #{tpu_custom_call.1} parent=5 // pred_check_branch
        %113 = sbr.rel (%p111) target = $region16
      $region15: #{tpu_custom_call.1} parent=5 // pred_region
        // Predicated region
        $region17: #{tpu_custom_call.1} parent=15 // pred_check
          %p114 = pneg %p37
        $region18: #{tpu_custom_call.1} parent=15 // pred_check_branch
          %116 = sbr.rel (%p114) target = $region20
        $region19: #{tpu_custom_call.1} parent=15 // pred_region
          %s117 = sand.u32 %s27, 1
          %s118 = scalar_lea.sflag [#allocation3], %s117
          %s119 = sand.u32 %s27, 1
          %s120 = smul.addr %s119, 8
          %s121 = scalar_lea.vmem [#allocation2], %s120
          %s122 = smul.u32 4, %s17
          %s124 = ssub.s32 128, 128
          %125 = vsyncadd %s118, %s124
          %s126 = smul.addr %s122, 32
          %s127 = scalar_lea.hbm %s0, %s126
          %s129 = sshll.u32 %s121, 4
          %s130 = int_to_ptr.vmem [resolvable:$true] %s129
          %132 = dma.hbm_to_vmem [thread:$0]  %s127, 128, %s130, %s118
        $region20: #{tpu_custom_call.1} parent=15 // pred_fallthru
          _
        // Predicated region
        $region21: #{tpu_custom_call.1} parent=15 // pred_check
          %p133 = pneg %p63
        $region22: #{tpu_custom_call.1} parent=15 // pred_check_branch
          %135 = sbr.rel (%p133) target = $region24
        $region23: #{tpu_custom_call.1} parent=15 // pred_region
          %s136 = sand.u32 %s53, 1
          %s137 = scalar_lea.sflag [#allocation6], %s136
          %s138 = sand.u32 %s53, 1
          %s139 = smul.addr %s138, 8
          %s140 = scalar_lea.vmem [#allocation5], %s139
          %s141 = smul.u32 4, %s17
          %s143 = ssub.s32 128, 128
          %144 = vsyncadd %s137, %s143
          %s145 = smul.addr %s141, 32
          %s146 = scalar_lea.hbm %s1, %s145
          %s148 = sshll.u32 %s140, 4
          %s149 = int_to_ptr.vmem [resolvable:$true] %s148
          %151 = dma.hbm_to_vmem [thread:$0]  %s146, 128, %s149, %s137
        $region24: #{tpu_custom_call.1} parent=15 // pred_fallthru
          _
      $region16: #{tpu_custom_call.1} parent=5 // pred_fallthru
        _
      %p152 = scmp.le.s32.totalorder 1, %s17
      %p153 = scmp.lt.s32.totalorder %s17, 3
      %p154 = pnand %p152, %p153
      %p155 = pneg %p154
      // Predicated region
      $region25: #{tpu_custom_call.1} parent=5 // pred_check
        _
      $region26: #{tpu_custom_call.1} parent=5 // pred_check_branch
        %157 = sbr.rel (%p154) target = $region28
      $region27: #{tpu_custom_call.1} parent=5 // pred_region
        %s158 = ssub.s32 %s17, 1
        %s159 = sand.u32 %s30, 1
        %s160 = scalar_lea.sflag [#allocation3], %s159
        %s161 = sand.u32 %s30, 1
        %s162 = smul.addr %s161, 8
        %s163 = scalar_lea.vmem [#allocation2], %s162
        // Predicated region
        $region29: #{tpu_custom_call.1} parent=27 // pred_check
          %p164 = pneg %p43
        $region30: #{tpu_custom_call.1} parent=27 // pred_check_branch
          %166 = sbr.rel (%p164) target = $region32
        $region31: #{tpu_custom_call.1} parent=27 // pred_region
          %167 = dma.done %s160, 128
        $region32: #{tpu_custom_call.1} parent=27 // pred_fallthru
          _
        %s168 = sand.u32 %s56, 1
        %s169 = scalar_lea.sflag [#allocation6], %s168
        %s170 = sand.u32 %s56, 1
        %s171 = smul.addr %s170, 8
        %s172 = scalar_lea.vmem [#allocation5], %s171
        // Predicated region
        $region33: #{tpu_custom_call.1} parent=27 // pred_check
          %p173 = pneg %p69
        $region34: #{tpu_custom_call.1} parent=27 // pred_check_branch
          %175 = sbr.rel (%p173) target = $region36
        $region35: #{tpu_custom_call.1} parent=27 // pred_region
          %176 = dma.done %s169, 128
        $region36: #{tpu_custom_call.1} parent=27 // pred_fallthru
          _
        %s177 = sand.u32 %s30, 1
        %s178 = scalar_lea.sflag [#allocation3], %s177
        %s179 = sand.u32 %s30, 1
        %s180 = smul.addr %s179, 8
        %s181 = scalar_lea.vmem [#allocation2], %s180
        %p182 = pneg %p43
        %p183 = pneg %p40
        %s184 = sand.u32 %s56, 1
        %s185 = scalar_lea.sflag [#allocation6], %s184
        %s186 = sand.u32 %s56, 1
        %s187 = smul.addr %s186, 8
        %s188 = scalar_lea.vmem [#allocation5], %s187
        %p189 = pneg %p69
        %p190 = pneg %p66
        %p191 = pneg %p95
        %p192 = pneg %p92
        %s193 = sand.u32 %s82, 1
        %s194 = scalar_lea.sflag [#allocation4], %s193
        %s195 = sand.u32 %s82, 1
        %s196 = smul.addr %s195, 16
        %s197 = scalar_lea.vmem [#allocation7], %s196
        %s198 = smul.u32 4, %s22
        %s199 = smul.u32 4, %s22
        %s200 = smul.u32 4, %s22
        %v201 = vld [vmem:[%s163] sm:$0xff]
        %v202 = vld [vmem:[%s172] sm:$0xff]
        %v203 = vadd.f32 %v201, %v202
        %v204 = vmul.f32 %v203, 0.70710677
        %v205 = vsub.f32 %v201, %v202
        %v206 = vmul.f32 %v205, 0.70710677
        %v209 = vunpack.c.l.s4 1966171168
        %v210 = vunpack.c.0.s8 %v209
        %v211 = vlaneseq
        %v212 = vshrl.u32 %v211, 7
        %v213 = vsub.s32 %v210, %v212
        %v214 = vrot.slane %v204, %v213
        %v215 = vcombine.high %v214, %v214
        %v218 = vunpack.c.l.s4 1966171168
        %v219 = vunpack.c.0.s8 %v218
        %v220 = vlaneseq
        %v221 = vshrl.u32 %v220, 7
        %v222 = vsub.s32 %v219, %v221
        %v223 = vrot.slane %v206, %v222
        %v224 = vcombine.high %v223, %v223
        %v225 = vlaneseq
        %v226 = vshrl.u32 %v225, 7
        %v227 = vsub.s32 0, %v226
        %v228 = vrot.slane %v214, %v227
        %v229 = vlaneseq
        %v230 = vshrl.u32 %v229, 7
        %v231 = vsub.s32 1, %v230
        %v232 = vrot.slane %v214, %v231
        %v233 = vlaneseq
        %v234 = vshrl.u32 %v233, 7
        %v235 = vsub.s32 2, %v234
        %v236 = vrot.slane %v214, %v235
        %v237 = vlaneseq
        %v238 = vshrl.u32 %v237, 7
        %v239 = vsub.s32 3, %v238
        %v240 = vrot.slane %v214, %v239
        %v241 = vlaneseq
        %v242 = vshrl.u32 %v241, 7
        %v243 = vsub.s32 0, %v242
        %v244 = vrot.slane %v215, %v243
        %v245 = vlaneseq
        %v246 = vshrl.u32 %v245, 7
        %v247 = vsub.s32 1, %v246
        %v248 = vrot.slane %v215, %v247
        %v249 = vlaneseq
        %v250 = vshrl.u32 %v249, 7
        %v251 = vsub.s32 2, %v250
        %v252 = vrot.slane %v215, %v251
        %v253 = vlaneseq
        %v254 = vshrl.u32 %v253, 7
        %v255 = vsub.s32 3, %v254
        %v256 = vrot.slane %v215, %v255
        %v265 = vlaneseq
        %v266 = vshrl.u32 %v265, 7
        %v267 = vsub.s32 0, %v266
        %v268 = vrot.slane %v223, %v267
        %v269 = vlaneseq
        %v270 = vshrl.u32 %v269, 7
        %v271 = vsub.s32 1, %v270
        %v272 = vrot.slane %v223, %v271
        %v273 = vlaneseq
        %v274 = vshrl.u32 %v273, 7
        %v275 = vsub.s32 2, %v274
        %v276 = vrot.slane %v223, %v275
        %v277 = vlaneseq
        %v278 = vshrl.u32 %v277, 7
        %v279 = vsub.s32 3, %v278
        %v280 = vrot.slane %v223, %v279
        %v281 = vlaneseq
        %v282 = vshrl.u32 %v281, 7
        %v283 = vsub.s32 0, %v282
        %v284 = vrot.slane %v224, %v283
        %v285 = vlaneseq
        %v286 = vshrl.u32 %v285, 7
        %v287 = vsub.s32 1, %v286
        %v288 = vrot.slane %v224, %v287
        %v289 = vlaneseq
        %v290 = vshrl.u32 %v289, 7
        %v291 = vsub.s32 2, %v290
        %v292 = vrot.slane %v224, %v291
        %v293 = vlaneseq
        %v294 = vshrl.u32 %v293, 7
        %v295 = vsub.s32 3, %v294
        %v296 = vrot.slane %v224, %v295
        %vm305 = vcmask 1040384
        %v306 = vsel %vm305, %v228, %v268
        %v307 = vsel %vm305, %v232, %v272
        %v308 = vsel %vm305, %v236, %v276
        %v309 = vsel %vm305, %v240, %v280
        %v310 = vsel %vm305, %v244, %v284
        %v311 = vsel %vm305, %v248, %v288
        %v312 = vsel %vm305, %v252, %v292
        %v313 = vsel %vm305, %v256, %v296
        %v322 = vcombine.low %v306, %v307
        %v323 = vcombine.low %v308, %v309
        %v325 = vunpack.c.l.s4 1983009808
        %v326 = vunpack.c.0.s8 %v325
        %v327 = vlaneseq
        %v328 = vshrl.u32 %v327, 7
        %v329 = vsub.s32 %v326, %v328
        %v330 = vrot.slane %v322, %v329
        %v332 = vunpack.c.l.s4 1983009808
        %v333 = vunpack.c.0.s8 %v332
        %v334 = vlaneseq
        %v335 = vshrl.u32 %v334, 7
        %v336 = vsub.s32 %v333, %v335
        %v337 = vrot.slane %v323, %v336
        %v338 = vcombine.low %v330, %v337
        %v339 = vcombine.low %v310, %v311
        %v340 = vcombine.low %v312, %v313
        %v342 = vunpack.c.l.s4 1983009808
        %v343 = vunpack.c.0.s8 %v342
        %v344 = vlaneseq
        %v345 = vshrl.u32 %v344, 7
        %v346 = vsub.s32 %v343, %v345
        %v347 = vrot.slane %v339, %v346
        %v349 = vunpack.c.l.s4 1983009808
        %v350 = vunpack.c.0.s8 %v349
        %v351 = vlaneseq
        %v352 = vshrl.u32 %v351, 7
        %v353 = vsub.s32 %v350, %v352
        %v354 = vrot.slane %v340, %v353
        %v355 = vcombine.low %v347, %v354
        %v356 = vcombine.low %v338, %v355
        %v357 = vcombine.high %v338, %v355
        %v359 = vunpack.c.l.s4 1983009808
        %v360 = vunpack.c.0.s8 %v359
        %v361 = vlaneseq
        %v362 = vshrl.u32 %v361, 7
        %v363 = vsub.s32 %v360, %v362
        %v364 = vrot.slane %v356, %v363
        %v366 = vunpack.c.l.s4 1983009808
        %v367 = vunpack.c.0.s8 %v366
        %v368 = vlaneseq
        %v369 = vshrl.u32 %v368, 7
        %v370 = vsub.s32 %v367, %v369
        %v371 = vrot.slane %v357, %v370
        %374 = vst [vmem:[%s197] sm:$0xff] %v364
        %375 = vst [vmem:[%s197 + $0x8] sm:$0xff] %v371
        %s376 = sand.u32 %s82, 1
        %s377 = scalar_lea.sflag [#allocation4], %s376
        %s378 = sand.u32 %s82, 1
        %s379 = smul.addr %s378, 16
        %s380 = scalar_lea.vmem [#allocation7], %s379
        // Predicated region
        $region37: #{tpu_custom_call.1} parent=27 // pred_check
          %p381 = pneg %p92
        $region38: #{tpu_custom_call.1} parent=27 // pred_check_branch
          %383 = sbr.rel (%p381) target = $region40
        $region39: #{tpu_custom_call.1} parent=27 // pred_region
          %s384 = smul.u32 4, %s22
          %s386 = ssub.s32 256, 256
          %387 = vsyncadd %s377, %s386
          %s388 = smul.addr %s384, 64
          %s389 = scalar_lea.hbm %s2, %s388
          %s391 = sshll.u32 %s380, 4
          %s392 = int_to_ptr.vmem [resolvable:$true] %s391
          %394 = dma.vmem_to_hbm [thread:$0]  %s392, 256, %s389, %s377
        $region40: #{tpu_custom_call.1} parent=27 // pred_fallthru
          _
      $region28: #{tpu_custom_call.1} parent=5 // pred_fallthru
        _
      %p395 = scmp.le.s32.totalorder 2, %s17
      // Predicated region
      $region41: #{tpu_custom_call.1} parent=5 // pred_check
        %p396 = pneg %p395
      $region42: #{tpu_custom_call.1} parent=5 // pred_check_branch
        %398 = sbr.rel (%p396) target = $region44
      $region43: #{tpu_custom_call.1} parent=5 // pred_region
        %s399 = ssub.s32 %s17, 2
        // Predicated region
        $region45: #{tpu_custom_call.1} parent=43 // pred_check
          %p400 = pneg %p98
        $region46: #{tpu_custom_call.1} parent=43 // pred_check_branch
          %402 = sbr.rel (%p400) target = $region48
        $region47: #{tpu_custom_call.1} parent=43 // pred_region
          %s403 = sand.u32 %s83, 1
          %s404 = scalar_lea.sflag [#allocation4], %s403
          %s405 = sand.u32 %s83, 1
          %s406 = smul.addr %s405, 16
          %s407 = scalar_lea.vmem [#allocation7], %s406
          %408 = dma.done %s404, 256
        $region48: #{tpu_custom_call.1} parent=43 // pred_fallthru
          _
      $region44: #{tpu_custom_call.1} parent=5 // pred_fallthru
        _
    $region6: #{tpu_custom_call.1} parent=1 // loop_footer
      %s21 = sadd.s32 1, %s17
    $region7: #{tpu_custom_call.1} parent=1 // loop_footer_branch
      %16 = sbr.rel target = $region3
    $region8: #{tpu_custom_call.1} parent=1 // loop_exit
      _
    %409 = vsyncpa [#allocation3], 1
    %s410 = scalar_lea.sflag [#allocation3], 1
    %411 = vsyncpa %s410, 1
    %412 = vsyncpa [#allocation6], 1
    %s413 = scalar_lea.sflag [#allocation6], 1
    %414 = vsyncpa %s413, 1
    %415 = vsyncpa [#allocation4], 1
    %s416 = scalar_lea.sflag [#allocation4], 1
    %417 = vsyncpa %s416, 1

</llo_original>
